<compile_context>
chip_gen: v6e
topology: v6e:2x2x1
jax: 0.10.0
libtpu: 0.0.40
codegen_flags: <defaults>
</compile_context>

<pallas_src>
import functools

import jax
import jax.numpy as jnp
from jax.experimental import pallas as pl
from jax.experimental.pallas import tpu as pltpu

_SUBLANE = 8


def _round_up(x, m):
    return ((x + m - 1) // m) * m


def _make_mlp_kernel(num_layers):
    """Kernel over refs (x, w1, b1, ..., wN, bN, out); ReLU on hidden layers."""

    def kernel(*refs):
        x_ref, o_ref = refs[0], refs[-1]
        wb = refs[1:-1]
        h = x_ref[...]
        for li in range(num_layers):
            w_ref = wb[2 * li]
            b_ref = wb[2 * li + 1]
            # MXU matmul with f32 accumulation; activations cast to the weight
            # dtype so the bf16 path uses native bf16 MXU operands.
            h = jnp.dot(h.astype(w_ref.dtype), w_ref[...],
                        preferred_element_type=jnp.float32)
            h = h + b_ref[...]                     # bias add in f32
            if li < num_layers - 1:
                h = jnp.maximum(h, 0.0)            # ReLU on hidden layers only
        o_ref[...] = h.astype(o_ref.dtype)         # (TB, 1) value column

    return kernel


@functools.partial(jax.jit, static_argnames=("block_b", "compute_dtype"))
def simple_value_fn(state, params, *, block_b=1024, compute_dtype=jnp.float32):
    """MLP value-function forward in one Pallas kernel, batch-tiled on a grid.

    state  : (B, state_dim) float32
    params : dict with w{i} of shape (in_i, out_i)  (== torch weight.T) and
             b{i} of shape (1, out_i), for i = 1..num_layers (last out = 1).
    returns: (B, 1) float32 state values
    """
    B, state_dim = state.shape
    num_layers = len(params) // 2
    weights = [params[f"w{i + 1}"] for i in range(num_layers)]
    biases = [params[f"b{i + 1}"] for i in range(num_layers)]

    cdt = jnp.dtype(compute_dtype)
    x = state.astype(cdt)
    weights = [w.astype(cdt) for w in weights]
    biases = [b.astype(jnp.float32) for b in biases]   # bias/ReLU stay f32

    # Batch tile: large (amortize per-step overhead), multiple of 8 sublanes,
    # and capped at ceil(B/2) so there are >=2 grid steps for v7x's two TCs.
    TB = min(block_b, -(-B // 2))
    TB = max(_SUBLANE, _round_up(TB, _SUBLANE))
    Bp = _round_up(B, TB)
    xp = x if Bp == B else jnp.pad(x, ((0, Bp - B), (0, 0)))

    grid = (Bp // TB,)

    # Streamed batch tile + resident (constant index_map) weights and biases.
    in_specs = [pl.BlockSpec((TB, state_dim), lambda i: (i, 0))]
    operands = [xp]
    for w, b in zip(weights, biases):
        in_specs.append(pl.BlockSpec(w.shape, lambda i: (0, 0)))
        in_specs.append(pl.BlockSpec(b.shape, lambda i: (0, 0)))
        operands.extend((w, b))

    grid_spec = pl.GridSpec(
        grid=grid,
        in_specs=in_specs,
        out_specs=pl.BlockSpec((TB, 1), lambda i: (i, 0)),
    )

    dims = [state_dim] + [w.shape[1] for w in weights]
    flops = 2 * Bp * sum(dims[i] * dims[i + 1] for i in range(num_layers))
    bytes_accessed = (
        xp.size * xp.dtype.itemsize                       # streamed input
        + Bp * 4                                          # (Bp, 1) f32 output
        + sum(w.size * w.dtype.itemsize for w in weights)
        + sum(b.size * b.dtype.itemsize for b in biases)
    )
    cost = pl.CostEstimate(flops=flops, transcendentals=0,
                           bytes_accessed=bytes_accessed)

    out = pl.pallas_call(
        _make_mlp_kernel(num_layers),
        out_shape=jax.ShapeDtypeStruct((Bp, 1), jnp.float32),
        grid_spec=grid_spec,
        compiler_params=pltpu.CompilerParams(
            dimension_semantics=("parallel",),
        ),
        cost_estimate=cost,
    )(*operands)

    return out[:B, :] if Bp != B else out


def init_params(key, state_dim, hdim):
    """Deterministic synthetic parameter init (shapes match nn.Linear layers)."""
    dims = [state_dim, *hdim, 1]
    params = {}
    for i in range(len(dims) - 1):
        key, kw, kb = jax.random.split(key, 3)
        bound = 1.0 / jnp.sqrt(dims[i])
        # stored as (in, out) == PyTorch weight.T
        params[f"w{i + 1}"] = jax.random.uniform(
            kw, (dims[i], dims[i + 1]), jnp.float32, -bound, bound)
        params[f"b{i + 1}"] = jax.random.uniform(
            kb, (1, dims[i + 1]), jnp.float32, -bound, bound)
    return params


def reference_forward(state, params):
    """Plain-JAX reference for correctness checking."""
    num_layers = len(params) // 2
    h = state
    for i in range(num_layers):
        h = h @ params[f"w{i + 1}"] + params[f"b{i + 1}"]
        if i < num_layers - 1:
            h = jnp.maximum(h, 0.0)
    return h


if __name__ == "__main__":
    key = jax.random.PRNGKey(0)
    state_dim, hdim = 32, (64, 64)

    key, k_params = jax.random.split(key)
    params = init_params(k_params, state_dim, hdim)

    # Small-batch check (single grid step, no batch padding).
    key, k1 = jax.random.split(key)
    state_small = jax.random.normal(k1, (8, state_dim), jnp.float32)
    out_small = jax.block_until_ready(simple_value_fn(state_small, params))
    ref_small = reference_forward(state_small, params)
    assert out_small.shape == (8, 1), out_small.shape
    assert jnp.allclose(out_small, ref_small, atol=1e-5, rtol=1e-5), \
        "small-batch mismatch vs reference"

    # Larger batch with explicit tile: batch padding + multi-step parallel grid.
    key, k2 = jax.random.split(key)
    state_big = jax.random.normal(k2, (1000, state_dim), jnp.float32)
    out_big = jax.block_until_ready(
        simple_value_fn(state_big, params, block_b=256))
    ref_big = reference_forward(state_big, params)
    assert out_big.shape == (1000, 1), out_big.shape
    assert jnp.allclose(out_big, ref_big, atol=1e-5, rtol=1e-5), \
        "large-batch mismatch vs reference"

    # Optional bf16-operand path (halves streamed HBM bytes on v6e/v7x);
    # tolerance-gated since bf16 MXU operands differ from f32 at ~1e-2 level.
    out_bf16 = jax.block_until_ready(
        simple_value_fn(state_big, params, block_b=256,
                        compute_dtype=jnp.bfloat16))
    assert out_bf16.shape == (1000, 1), out_bf16.shape
    assert jnp.allclose(out_bf16, ref_big, atol=2e-1, rtol=2e-1), \
        "bf16-path mismatch vs reference beyond loose tolerance"

    print("KERNEL_OK")
</pallas_src>

<mosaic_0001>
module attributes {stable_mosaic.version = 11 : i64} {
  func.func @kernel(%arg0: i32, %arg1: memref<8x32xf32, #tpu.memory_space<vmem>>, %arg2: memref<32x64xf32, #tpu.memory_space<vmem>>, %arg3: memref<1x64xf32, #tpu.memory_space<vmem>>, %arg4: memref<64x64xf32, #tpu.memory_space<vmem>>, %arg5: memref<1x64xf32, #tpu.memory_space<vmem>>, %arg6: memref<64x1xf32, #tpu.memory_space<vmem>>, %arg7: memref<1x1xf32, #tpu.memory_space<vmem>>, %arg8: memref<8x1xf32, #tpu.memory_space<vmem>>) attributes {dimension_semantics = [#tpu.dimension_semantics<parallel>], iteration_bounds = array<i64: 1>, scalar_prefetch = 0 : i64, scratch_operands = 0 : i64, tpu.core_type = #tpu.core_type<tc>, window_params = [{transform_indices = @transform_0, window_bounds = array<i64: 8, 32>}, {pipeline_mode = #tpu.pipeline_mode<synchronous>, transform_indices = @transform_1, window_bounds = array<i64: 32, 64>}, {pipeline_mode = #tpu.pipeline_mode<synchronous>, transform_indices = @transform_2, window_bounds = array<i64: 1, 64>}, {pipeline_mode = #tpu.pipeline_mode<synchronous>, transform_indices = @transform_3, window_bounds = array<i64: 64, 64>}, {pipeline_mode = #tpu.pipeline_mode<synchronous>, transform_indices = @transform_4, window_bounds = array<i64: 1, 64>}, {pipeline_mode = #tpu.pipeline_mode<synchronous>, transform_indices = @transform_5, window_bounds = array<i64: 64, 1>}, {pipeline_mode = #tpu.pipeline_mode<synchronous>, transform_indices = @transform_6, window_bounds = array<i64: 1, 1>}, {transform_indices = @transform_7, window_bounds = array<i64: 8, 1>}]} {
    %c0 = arith.constant 0 : index
    %c0_0 = arith.constant 0 : index
    %0 = vector.load %arg1[%c0, %c0_0] : memref<8x32xf32, #tpu.memory_space<vmem>>, vector<8x32xf32>
    %c0_1 = arith.constant 0 : index
    %c0_2 = arith.constant 0 : index
    %1 = vector.load %arg2[%c0_1, %c0_2] : memref<32x64xf32, #tpu.memory_space<vmem>>, vector<32x64xf32>
    %cst = arith.constant dense<0.000000e+00> : vector<8x64xf32>
    %2 = tpu.matmul %0, %1, %cst {dimension_numbers = #tpu.dot_dimension_numbers<[1], [0], [0], [1], [0, 0, 1, 1], [], []>} : vector<8x32xf32>, vector<32x64xf32>, vector<8x64xf32> -> vector<8x64xf32>
    %c0_3 = arith.constant 0 : index
    %c0_4 = arith.constant 0 : index
    %3 = vector.load %arg3[%c0_3, %c0_4] : memref<1x64xf32, #tpu.memory_space<vmem>>, vector<1x64xf32>
    %4 = vector.broadcast %3 : vector<1x64xf32> to vector<8x64xf32>
    %5 = arith.addf %2, %4 : vector<8x64xf32>
    %cst_5 = arith.constant 0.000000e+00 : f32
    %6 = vector.broadcast %cst_5 : f32 to vector<8x64xf32>
    %7 = arith.maximumf %5, %6 : vector<8x64xf32>
    %c0_6 = arith.constant 0 : index
    %c0_7 = arith.constant 0 : index
    %8 = vector.load %arg4[%c0_6, %c0_7] : memref<64x64xf32, #tpu.memory_space<vmem>>, vector<64x64xf32>
    %cst_8 = arith.constant dense<0.000000e+00> : vector<8x64xf32>
    %9 = tpu.matmul %7, %8, %cst_8 {dimension_numbers = #tpu.dot_dimension_numbers<[1], [0], [0], [1], [0, 0, 1, 1], [], []>} : vector<8x64xf32>, vector<64x64xf32>, vector<8x64xf32> -> vector<8x64xf32>
    %c0_9 = arith.constant 0 : index
    %c0_10 = arith.constant 0 : index
    %10 = vector.load %arg5[%c0_9, %c0_10] : memref<1x64xf32, #tpu.memory_space<vmem>>, vector<1x64xf32>
    %11 = vector.broadcast %10 : vector<1x64xf32> to vector<8x64xf32>
    %12 = arith.addf %9, %11 : vector<8x64xf32>
    %cst_11 = arith.constant 0.000000e+00 : f32
    %13 = vector.broadcast %cst_11 : f32 to vector<8x64xf32>
    %14 = arith.maximumf %12, %13 : vector<8x64xf32>
    %c0_12 = arith.constant 0 : index
    %c0_13 = arith.constant 0 : index
    %15 = vector.load %arg6[%c0_12, %c0_13] : memref<64x1xf32, #tpu.memory_space<vmem>>, vector<64x1xf32>
    %cst_14 = arith.constant dense<0.000000e+00> : vector<8x1xf32>
    %16 = tpu.matmul %14, %15, %cst_14 {dimension_numbers = #tpu.dot_dimension_numbers<[1], [0], [0], [1], [0, 0, 1, 1], [], []>} : vector<8x64xf32>, vector<64x1xf32>, vector<8x1xf32> -> vector<8x1xf32>
    %c0_15 = arith.constant 0 : index
    %c0_16 = arith.constant 0 : index
    %17 = vector.load %arg7[%c0_15, %c0_16] : memref<1x1xf32, #tpu.memory_space<vmem>>, vector<1x1xf32>
    %18 = vector.broadcast %17 : vector<1x1xf32> to vector<8x1xf32>
    %19 = arith.addf %16, %18 : vector<8x1xf32>
    %c0_17 = arith.constant 0 : index
    %c0_18 = arith.constant 0 : index
    %20 = vector.load %arg8[%c0_17, %c0_18] : memref<8x1xf32, #tpu.memory_space<vmem>>, vector<8x1xf32>
    tpu.vector_store %arg8[%c0_17, %c0_18], %19 {strides = array<i32>} : memref<8x1xf32, #tpu.memory_space<vmem>>, vector<8x1xf32>,
    return
  }
  func.func @transform_0(%arg0: i32) -> (i32, i32) {
    %c0_i32 = arith.constant 0 : i32
    %c0_i32_0 = arith.constant 0 : i32
    return %arg0, %c0_i32 : i32, i32
  }
  func.func @transform_1(%arg0: i32) -> (i32, i32) {
    %c0_i32 = arith.constant 0 : i32
    %c0_i32_0 = arith.constant 0 : i32
    %c0_i32_1 = arith.constant 0 : i32
    return %c0_i32, %c0_i32_0 : i32, i32
  }
  func.func @transform_2(%arg0: i32) -> (i32, i32) {
    %c0_i32 = arith.constant 0 : i32
    %c0_i32_0 = arith.constant 0 : i32
    %c0_i32_1 = arith.constant 0 : i32
    return %c0_i32, %c0_i32_0 : i32, i32
  }
  func.func @transform_3(%arg0: i32) -> (i32, i32) {
    %c0_i32 = arith.constant 0 : i32
    %c0_i32_0 = arith.constant 0 : i32
    %c0_i32_1 = arith.constant 0 : i32
    return %c0_i32, %c0_i32_0 : i32, i32
  }
  func.func @transform_4(%arg0: i32) -> (i32, i32) {
    %c0_i32 = arith.constant 0 : i32
    %c0_i32_0 = arith.constant 0 : i32
    %c0_i32_1 = arith.constant 0 : i32
    return %c0_i32, %c0_i32_0 : i32, i32
  }
  func.func @transform_5(%arg0: i32) -> (i32, i32) {
    %c0_i32 = arith.constant 0 : i32
    %c0_i32_0 = arith.constant 0 : i32
    %c0_i32_1 = arith.constant 0 : i32
    return %c0_i32, %c0_i32_0 : i32, i32
  }
  func.func @transform_6(%arg0: i32) -> (i32, i32) {
    %c0_i32 = arith.constant 0 : i32
    %c0_i32_0 = arith.constant 0 : i32
    %c0_i32_1 = arith.constant 0 : i32
    return %c0_i32, %c0_i32_0 : i32, i32
  }
  func.func @transform_7(%arg0: i32) -> (i32, i32) {
    %c0_i32 = arith.constant 0 : i32
    %c0_i32_0 = arith.constant 0 : i32
    return %arg0, %c0_i32 : i32, i32
  }
}

</mosaic_0001>

<llo_original>
// kernel: simple_value_fn.1
$region0: #{simple_value_fn.1}
  #allocation0 [shape = 'u32[]', space=smem, size = 0x4, offset = 0x4, fixed_abs, tag = 'smem constant byte address 0x4 - core index']
  #allocation1 [shape = 'u32[144,128]{1,0:T(1,128)}', space=vmem, size = 0x12000, scoped, tag = 'internal scratch']
  #allocation2 [shape = 'f32[1,1]{1,0:T(1,128)S(1)}', space=vmem, size = 0x200, scoped, tag = 'scoped memory for simple_value_fn.1']
  %s0 = inlined_call_operand.vmem [shape: f32[8,32], index: 0, kind: input, shape index: {}]
  %s1 = inlined_call_operand.hbm [shape: f32[32,64], index: 1, kind: input, shape index: {}]
  %s2 = inlined_call_operand.vmem [shape: f32[1,64], index: 2, kind: input, shape index: {}]
  %s3 = inlined_call_operand.vmem [shape: f32[64,64], index: 3, kind: input, shape index: {}]
  %s4 = inlined_call_operand.vmem [shape: f32[1,64], index: 4, kind: input, shape index: {}]
  %s5 = inlined_call_operand.vmem [shape: f32[64,1], index: 5, kind: input, shape index: {}]
  %s6 = inlined_call_operand.<no memory space> [shape: f32[1,1], index: 6, kind: input, shape index: {}]
  %s7 = inlined_call_operand.vmem [shape: f32[8,1], index: 7, kind: output, shape index: {}]
  %s8 = sld [smem:[#allocation0]]
  $region42: #{simple_value_fn.1} parent=0
    _
  %s10 = ssub.s32 1, %s8
  %s11 = scalar_select 0, %s10, %s8
  %v12 = vstv %s6
  %13 = vst [vmem:[#allocation2] sm:$0x1] %v12
  $region1: #{simple_value_fn.1} parent=0
    #allocation3 [shape = 'u8[16384]{0}', space=vmem, size = 0x4000, scoped, tag = 'input window, operand 1, single buffered']
    #allocation4 [shape = 's32[1]{0}', space=sflag, size = 0x4, scoped, tag = 'scoped memory for simple_value_fn.1']
    %14 = vsyncpa [#allocation4], 0
    // Predicated region
    $region2: #{simple_value_fn.1} parent=1 // pred_check
      _
    $region3: #{simple_value_fn.1} parent=1 // pred_check_branch
      %16 = sbr.rel (0) target = $region5
    $region4: #{simple_value_fn.1} parent=1 // pred_region
      _
    $region5: #{simple_value_fn.1} parent=1 // pred_fallthru
      _
    // Predicated region
    $region6: #{simple_value_fn.1} parent=1 // pred_check
      _
    $region7: #{simple_value_fn.1} parent=1 // pred_check_branch
      %18 = sbr.rel (0) target = $region9
    $region8: #{simple_value_fn.1} parent=1 // pred_region
      %s20 = ssub.s32 512, 512
      %21 = vsyncadd [#allocation4], %s20
      %s22 = sshll.u32 [#allocation3], 4
      %s23 = int_to_ptr.vmem [resolvable:$true] %s22
      %28 = dma.hbm_to_vmem [thread:$0]  %s1, 512, %s23, [#allocation4], 128, 128, 8
    $region9: #{simple_value_fn.1} parent=1 // pred_fallthru
      _
    // Predicated region
    $region10: #{simple_value_fn.1} parent=1 // pred_check
      _
    $region11: #{simple_value_fn.1} parent=1 // pred_check_branch
      %30 = sbr.rel (0) target = $region13
    $region12: #{simple_value_fn.1} parent=1 // pred_region
      _
    $region13: #{simple_value_fn.1} parent=1 // pred_fallthru
      _
    // Predicated region
    $region14: #{simple_value_fn.1} parent=1 // pred_check
      _
    $region15: #{simple_value_fn.1} parent=1 // pred_check_branch
      %32 = sbr.rel (0) target = $region17
    $region16: #{simple_value_fn.1} parent=1 // pred_region
      _
    $region17: #{simple_value_fn.1} parent=1 // pred_fallthru
      _
    // Predicated region
    $region18: #{simple_value_fn.1} parent=1 // pred_check
      _
    $region19: #{simple_value_fn.1} parent=1 // pred_check_branch
      %34 = sbr.rel (0) target = $region21
    $region20: #{simple_value_fn.1} parent=1 // pred_region
      _
    $region21: #{simple_value_fn.1} parent=1 // pred_fallthru
      _
    // Predicated region
    $region22: #{simple_value_fn.1} parent=1 // pred_check
      _
    $region23: #{simple_value_fn.1} parent=1 // pred_check_branch
      %36 = sbr.rel (0) target = $region25
    $region24: #{simple_value_fn.1} parent=1 // pred_region
      _
    $region25: #{simple_value_fn.1} parent=1 // pred_fallthru
      _
    // Predicated region
    $region26: #{simple_value_fn.1} parent=1 // pred_check
      _
    $region27: #{simple_value_fn.1} parent=1 // pred_check_branch
      %38 = sbr.rel (0) target = $region29
    $region28: #{simple_value_fn.1} parent=1 // pred_region
      _
    $region29: #{simple_value_fn.1} parent=1 // pred_fallthru
      _
    // Predicated region
    $region30: #{simple_value_fn.1} parent=1 // pred_check
      _
    $region31: #{simple_value_fn.1} parent=1 // pred_check_branch
      %40 = sbr.rel (0) target = $region33
    $region32: #{simple_value_fn.1} parent=1 // pred_region
      %41 = dma.done [#allocation4], 512
    $region33: #{simple_value_fn.1} parent=1 // pred_fallthru
      _
    %v42 = vld [vmem:[%s0] sm:$0xff]
    %v43 = vld [vmem:[#allocation3] sm:$0xff]
    %v44 = vld [vmem:[#allocation3 + $0x8] sm:$0xff]
    %v45 = vld [vmem:[#allocation3 + $0x10] sm:$0xff]
    %v46 = vld [vmem:[#allocation3 + $0x18] sm:$0xff]
    %v47 = vld [vmem:[%s2] sm:$0x1]
    %v49 = vlaneseq
    %v50 = vshrl.u32 %v49, 7
    %v51 = vsub.s32 0, %v50
    %v52 = vrot.slane %v47, %v51
    %vm54 = vcmask 261120
    %v56 = vsel %vm54, %v42, 0
    %58 = vmatprep.subr.mxu0 0.0
    %59 = vmatpush1.msra.mxu0 0.0
    %60 = vmatprep.subr.mxu0 0.0
    %61 = vmatpush1.msra.mxu0 0.0
    %62 = vmatprep.subr.mxu0 0.0
    %63 = vmatpush1.msra.mxu0 0.0
    %64 = vmatprep.subr.mxu0 0.0
    %65 = vmatpush1.msra.mxu0 0.0
    %66 = vmatprep.subr.mxu0 0.0
    %67 = vmatpush1.msra.mxu0 0.0
    %68 = vmatprep.subr.mxu0 0.0
    %69 = vmatpush1.msra.mxu0 0.0
    %70 = vmatprep.subr.mxu0 0.0
    %71 = vmatpush1.msra.mxu0 0.0
    %72 = vmatprep.subr.mxu0 0.0
    %73 = vmatpush1.msra.mxu0 0.0
    %74 = vmatprep.subr.mxu0 0.0
    %75 = vmatpush1.msra.mxu0 0.0
    %76 = vmatprep.subr.mxu0 0.0
    %77 = vmatpush1.msra.mxu0 0.0
    %78 = vmatprep.subr.mxu0 0.0
    %79 = vmatpush1.msra.mxu0 0.0
    %80 = vmatprep.subr.mxu0 0.0
    %81 = vmatpush1.msra.mxu0 0.0
    %82 = vmatprep.subr.mxu0 0.0
    %83 = vmatpush1.msra.mxu0 %v46
    %84 = vmatprep.subr.mxu0 0.0
    %85 = vmatpush1.msra.mxu0 %v45
    %86 = vmatprep.subr.mxu0 0.0
    %87 = vmatpush1.msra.mxu0 %v44
    %88 = vmatprep.subr.mxu0 0.0
    %89 = vmatpush1.msra.mxu0 %v43
    %90 = vmatprep.subr.mxu0 0.0
    %91 = vmatpush2.msra.mxu0 0.0
    %92 = vmatprep.subr.mxu0 0.0
    %93 = vmatpush2.msra.mxu0 0.0
    %94 = vmatprep.subr.mxu0 0.0
    %95 = vmatpush2.msra.mxu0 0.0
    %96 = vmatprep.subr.mxu0 0.0
    %97 = vmatpush2.msra.mxu0 0.0
    %98 = vmatprep.subr.mxu0 0.0
    %99 = vmatpush2.msra.mxu0 0.0
    %100 = vmatprep.subr.mxu0 0.0
    %101 = vmatpush2.msra.mxu0 0.0
    %102 = vmatprep.subr.mxu0 0.0
    %103 = vmatpush2.msra.mxu0 0.0
    %104 = vmatprep.subr.mxu0 0.0
    %105 = vmatpush2.msra.mxu0 0.0
    %106 = vmatprep.subr.mxu0 0.0
    %107 = vmatpush2.msra.mxu0 0.0
    %108 = vmatprep.subr.mxu0 0.0
    %109 = vmatpush2.msra.mxu0 0.0
    %110 = vmatprep.subr.mxu0 0.0
    %111 = vmatpush2.msra.mxu0 0.0
    %112 = vmatprep.subr.mxu0 0.0
    %113 = vmatpush2.msra.mxu0 0.0
    %114 = vmatprep.subr.mxu0 0.0
    %115 = vmatpush2.msra.mxu0 0.0
    %116 = vmatprep.subr.mxu0 0.0
    %117 = vmatpush2.msra.mxu0 0.0
    %118 = vmatprep.subr.mxu0 0.0
    %119 = vmatpush2.msra.mxu0 0.0
    %120 = vmatprep.subr.mxu0 0.0
    %121 = vmatpush2.msra.mxu0 0.0
    %122 = vmatprep.mubr.f32.mxu0 0.0
    %123 = vmatmul.mubr.f32.gmra.mxu0 %v56
    %v124 = vpop.f32.mrf.mxu0
    %v125 = vadd.f32 %v52, %v124
    %v126 = vpop.f32.mrf.mxu0
    %127 = vdwg.mxu0
    %v128 = vmax.f32 %v125, 0.0
    %v129 = vld [vmem:[%s3] sm:$0xff]
    %v130 = vld [vmem:[%s3 + $0x8] sm:$0xff]
    %v131 = vld [vmem:[%s3 + $0x10] sm:$0xff]
    %v132 = vld [vmem:[%s3 + $0x18] sm:$0xff]
    %v133 = vld [vmem:[%s3 + $0x20] sm:$0xff]
    %v134 = vld [vmem:[%s3 + $0x28] sm:$0xff]
    %v135 = vld [vmem:[%s3 + $0x30] sm:$0xff]
    %v136 = vld [vmem:[%s3 + $0x38] sm:$0xff]
    %v137 = vld [vmem:[%s4] sm:$0x1]
    %v139 = vlaneseq
    %v140 = vshrl.u32 %v139, 7
    %v141 = vsub.s32 0, %v140
    %v142 = vrot.slane %v137, %v141
    %vm144 = vcmask 523264
    %v146 = vsel %vm144, %v128, 0
    %148 = vmatprep.subr.mxu0 0.0
    %149 = vmatpush1.msra.mxu0 0.0
    %150 = vmatprep.subr.mxu0 0.0
    %151 = vmatpush1.msra.mxu0 0.0
    %152 = vmatprep.subr.mxu0 0.0
    %153 = vmatpush1.msra.mxu0 0.0
    %154 = vmatprep.subr.mxu0 0.0
    %155 = vmatpush1.msra.mxu0 0.0
    %156 = vmatprep.subr.mxu0 0.0
    %157 = vmatpush1.msra.mxu0 0.0
    %158 = vmatprep.subr.mxu0 0.0
    %159 = vmatpush1.msra.mxu0 0.0
    %160 = vmatprep.subr.mxu0 0.0
    %161 = vmatpush1.msra.mxu0 0.0
    %162 = vmatprep.subr.mxu0 0.0
    %163 = vmatpush1.msra.mxu0 0.0
    %164 = vmatprep.subr.mxu0 0.0
    %165 = vmatpush1.msra.mxu0 %v136
    %166 = vmatprep.subr.mxu0 0.0
    %167 = vmatpush1.msra.mxu0 %v135
    %168 = vmatprep.subr.mxu0 0.0
    %169 = vmatpush1.msra.mxu0 %v134
    %170 = vmatprep.subr.mxu0 0.0
    %171 = vmatpush1.msra.mxu0 %v133
    %172 = vmatprep.subr.mxu0 0.0
    %173 = vmatpush1.msra.mxu0 %v132
    %174 = vmatprep.subr.mxu0 0.0
    %175 = vmatpush1.msra.mxu0 %v131
    %176 = vmatprep.subr.mxu0 0.0
    %177 = vmatpush1.msra.mxu0 %v130
    %178 = vmatprep.subr.mxu0 0.0
    %179 = vmatpush1.msra.mxu0 %v129
    %180 = vmatprep.subr.mxu0 0.0
    %181 = vmatpush2.msra.mxu0 0.0
    %182 = vmatprep.subr.mxu0 0.0
    %183 = vmatpush2.msra.mxu0 0.0
    %184 = vmatprep.subr.mxu0 0.0
    %185 = vmatpush2.msra.mxu0 0.0
    %186 = vmatprep.subr.mxu0 0.0
    %187 = vmatpush2.msra.mxu0 0.0
    %188 = vmatprep.subr.mxu0 0.0
    %189 = vmatpush2.msra.mxu0 0.0
    %190 = vmatprep.subr.mxu0 0.0
    %191 = vmatpush2.msra.mxu0 0.0
    %192 = vmatprep.subr.mxu0 0.0
    %193 = vmatpush2.msra.mxu0 0.0
    %194 = vmatprep.subr.mxu0 0.0
    %195 = vmatpush2.msra.mxu0 0.0
    %196 = vmatprep.subr.mxu0 0.0
    %197 = vmatpush2.msra.mxu0 0.0
    %198 = vmatprep.subr.mxu0 0.0
    %199 = vmatpush2.msra.mxu0 0.0
    %200 = vmatprep.subr.mxu0 0.0
    %201 = vmatpush2.msra.mxu0 0.0
    %202 = vmatprep.subr.mxu0 0.0
    %203 = vmatpush2.msra.mxu0 0.0
    %204 = vmatprep.subr.mxu0 0.0
    %205 = vmatpush2.msra.mxu0 0.0
    %206 = vmatprep.subr.mxu0 0.0
    %207 = vmatpush2.msra.mxu0 0.0
    %208 = vmatprep.subr.mxu0 0.0
    %209 = vmatpush2.msra.mxu0 0.0
    %210 = vmatprep.subr.mxu0 0.0
    %211 = vmatpush2.msra.mxu0 0.0
    %212 = vmatprep.mubr.f32.mxu0 0.0
    %213 = vmatmul.mubr.f32.gmra.mxu0 %v146
    %v214 = vpop.f32.mrf.mxu0
    %v215 = vadd.f32 %v142, %v214
    %v216 = vpop.f32.mrf.mxu0
    %217 = vdwg.mxu0
    %v218 = vmax.f32 %v215, 0.0
    %v219 = vld [vmem:[%s5] sm:$0xff]
    %v220 = vld [vmem:[%s5 + $0x8] sm:$0xff]
    %v221 = vld [vmem:[%s5 + $0x10] sm:$0xff]
    %v222 = vld [vmem:[%s5 + $0x18] sm:$0xff]
    %v223 = vld [vmem:[%s5 + $0x20] sm:$0xff]
    %v224 = vld [vmem:[%s5 + $0x28] sm:$0xff]
    %v225 = vld [vmem:[%s5 + $0x30] sm:$0xff]
    %v226 = vld [vmem:[%s5 + $0x38] sm:$0xff]
    %v227 = vld [vmem:[#allocation2] sm:$0x1]
    %v229 = vlaneseq
    %v230 = vshrl.u32 %v229, 7
    %v231 = vsub.s32 0, %v230
    %v232 = vrot.slane %v227, %v231
    %v235 = vsel %vm144, %v218, 0
    %237 = vmatprep.subr.mxu0 0.0
    %238 = vmatpush1.msra.mxu0 0.0
    %239 = vmatprep.subr.mxu0 0.0
    %240 = vmatpush1.msra.mxu0 0.0
    %241 = vmatprep.subr.mxu0 0.0
    %242 = vmatpush1.msra.mxu0 0.0
    %243 = vmatprep.subr.mxu0 0.0
    %244 = vmatpush1.msra.mxu0 0.0
    %245 = vmatprep.subr.mxu0 0.0
    %246 = vmatpush1.msra.mxu0 0.0
    %247 = vmatprep.subr.mxu0 0.0
    %248 = vmatpush1.msra.mxu0 0.0
    %249 = vmatprep.subr.mxu0 0.0
    %250 = vmatpush1.msra.mxu0 0.0
    %251 = vmatprep.subr.mxu0 0.0
    %252 = vmatpush1.msra.mxu0 0.0
    %253 = vmatprep.subr.mxu0 0.0
    %254 = vmatpush1.msra.mxu0 %v226
    %255 = vmatprep.subr.mxu0 0.0
    %256 = vmatpush1.msra.mxu0 %v225
    %257 = vmatprep.subr.mxu0 0.0
    %258 = vmatpush1.msra.mxu0 %v224
    %259 = vmatprep.subr.mxu0 0.0
    %260 = vmatpush1.msra.mxu0 %v223
    %261 = vmatprep.subr.mxu0 0.0
    %262 = vmatpush1.msra.mxu0 %v222
    %263 = vmatprep.subr.mxu0 0.0
    %264 = vmatpush1.msra.mxu0 %v221
    %265 = vmatprep.subr.mxu0 0.0
    %266 = vmatpush1.msra.mxu0 %v220
    %267 = vmatprep.subr.mxu0 0.0
    %268 = vmatpush1.msra.mxu0 %v219
    %269 = vmatprep.subr.mxu0 0.0
    %270 = vmatpush2.msra.mxu0 0.0
    %271 = vmatprep.subr.mxu0 0.0
    %272 = vmatpush2.msra.mxu0 0.0
    %273 = vmatprep.subr.mxu0 0.0
    %274 = vmatpush2.msra.mxu0 0.0
    %275 = vmatprep.subr.mxu0 0.0
    %276 = vmatpush2.msra.mxu0 0.0
    %277 = vmatprep.subr.mxu0 0.0
    %278 = vmatpush2.msra.mxu0 0.0
    %279 = vmatprep.subr.mxu0 0.0
    %280 = vmatpush2.msra.mxu0 0.0
    %281 = vmatprep.subr.mxu0 0.0
    %282 = vmatpush2.msra.mxu0 0.0
    %283 = vmatprep.subr.mxu0 0.0
    %284 = vmatpush2.msra.mxu0 0.0
    %285 = vmatprep.subr.mxu0 0.0
    %286 = vmatpush2.msra.mxu0 0.0
    %287 = vmatprep.subr.mxu0 0.0
    %288 = vmatpush2.msra.mxu0 0.0
    %289 = vmatprep.subr.mxu0 0.0
    %290 = vmatpush2.msra.mxu0 0.0
    %291 = vmatprep.subr.mxu0 0.0
    %292 = vmatpush2.msra.mxu0 0.0
    %293 = vmatprep.subr.mxu0 0.0
    %294 = vmatpush2.msra.mxu0 0.0
    %295 = vmatprep.subr.mxu0 0.0
    %296 = vmatpush2.msra.mxu0 0.0
    %297 = vmatprep.subr.mxu0 0.0
    %298 = vmatpush2.msra.mxu0 0.0
    %299 = vmatprep.subr.mxu0 0.0
    %300 = vmatpush2.msra.mxu0 0.0
    %301 = vmatprep.mubr.f32.mxu0 0.0
    %302 = vmatmul.mubr.f32.gmra.mxu0 %v235
    %v303 = vpop.f32.mrf.mxu0
    %v304 = vadd.f32 %v232, %v303
    %v305 = vpop.f32.mrf.mxu0
    %306 = vdwg.mxu0
    %vm307 = vcmask 7168
    %308 = vst.msk [vmem:[%s7] sm:$0xff] %vm307, %v304
    // Predicated region
    $region34: #{simple_value_fn.1} parent=1 // pred_check
      _
    $region35: #{simple_value_fn.1} parent=1 // pred_check_branch
      %310 = sbr.rel (0) target = $region37
    $region36: #{simple_value_fn.1} parent=1 // pred_region
      _
    $region37: #{simple_value_fn.1} parent=1 // pred_fallthru
      _
    // Predicated region
    $region38: #{simple_value_fn.1} parent=1 // pred_check
      _
    $region39: #{simple_value_fn.1} parent=1 // pred_check_branch
      %312 = sbr.rel (0) target = $region41
    $region40: #{simple_value_fn.1} parent=1 // pred_region
      _
    $region41: #{simple_value_fn.1} parent=1 // pred_fallthru
      _
    %313 = vsyncpa [#allocation4], 1

</llo_original>
